<compile_context>
chip_gen: v5e
topology: v5e:2x2
jax: 0.10.0
libtpu: 0.0.40
codegen_flags: <defaults>
</compile_context>

<pallas_src>
import jax
import jax.numpy as jnp
from jax.experimental import pallas as pl
from jax.experimental.pallas import tpu as pltpu


def _round_up(x, m):
    return ((x + m - 1) // m) * m


def _resident_block_spec(shape):
    """Constant-index resident block; single-buffered (never re-fetched) when supported."""
    try:
        return pl.BlockSpec(shape, lambda i: (0, 0), pipeline_mode=pl.Buffered(1))
    except TypeError:  # older jax without pipeline_mode: default double-buffering
        return pl.BlockSpec(shape, lambda i: (0, 0))


def vector_embedding_kernel(x_ref, w1_ref, b1_ref, w2_ref, b2_ref, o_ref):
    cdt = w1_ref.dtype                                   # MXU operand dtype (bf16)
    x = x_ref[...].astype(cdt)
    # linear_1: bf16 MXU operands, f32 accumulation; bias add in f32.
    h = jnp.dot(x, w1_ref[...], preferred_element_type=jnp.float32) + b1_ref[...]
    # SiLU = h * sigmoid(h), with sigmoid(h) = 0.5*(1 + tanh(h/2)): exact, single EUP op.
    h = h * (0.5 * (1.0 + jnp.tanh(0.5 * h)))
    # linear_2.
    out = jnp.dot(h.astype(cdt), w2_ref[...], preferred_element_type=jnp.float32) + b2_ref[...]
    o_ref[...] = out.astype(o_ref.dtype)


def vector_embedding(x, w1_t, b1, w2_t, b2, *, tile_b=1024,
                     compute_dtype=jnp.bfloat16,
                     vmem_budget_bytes=48 * 1024 * 1024):
    """y = linear_2(SiLU(linear_1(x))).

    x:    (B, input_features); output dtype matches x.dtype.
    w1_t: (input_features, num_features)  -- PyTorch linear_1.weight pre-transposed.
    b1:   (num_features,)
    w2_t: (num_features, num_features)    -- PyTorch linear_2.weight pre-transposed.
    b2:   (num_features,)
    """
    B, d_in = x.shape
    d_out = w1_t.shape[1]
    assert w1_t.shape == (d_in, d_out)
    assert w2_t.shape == (d_out, d_out)
    assert b1.shape == (d_out,) and b2.shape == (d_out,)

    # Pad num_features to a multiple of 128 (lane-dense stores / full MXU columns).
    # Zero padding is exact: padded h columns are 0, SiLU(0)=0, padded outputs are 0.
    d_pad = _round_up(d_out, 128)
    if d_pad != d_out:
        p = d_pad - d_out
        w1_t = jnp.pad(w1_t, ((0, 0), (0, p)))
        w2_t = jnp.pad(w2_t, ((0, p), (0, p)))
        b1 = jnp.pad(b1, (0, p))
        b2 = jnp.pad(b2, (0, p))

    # Weights are VMEM-resident for the whole call: cast to bf16 once host-side
    # (halves residency, MXU-native). Bias / activation math stays f32.
    w1c = w1_t.astype(compute_dtype)
    w2c = w2_t.astype(compute_dtype)
    b1_2d = b1.reshape(1, d_pad).astype(jnp.float32)
    b2_2d = b2.reshape(1, d_pad).astype(jnp.float32)

    o_dtype = x.dtype                        # bf16 in -> bf16 out; f32 in -> f32 out
    x_item = jnp.dtype(x.dtype).itemsize
    o_item = jnp.dtype(o_dtype).itemsize
    w_item = jnp.dtype(compute_dtype).itemsize

    # --- Batch-tile sizing from a VMEM budget valid on every generation -----
    resident = (d_in * d_pad + d_pad * d_pad) * w_item + 2 * d_pad * 4
    per_row = (2 * d_in * x_item             # double-buffered x tile
               + 2 * d_pad * o_item          # double-buffered out tile
               + d_pad * 4 + d_pad * w_item  # f32 h + bf16 h temporaries
               + d_in * w_item)              # bf16 x cast
    tb_cap = max(8, (vmem_budget_bytes - resident) // max(per_row, 1))
    tb = min(tile_b, tb_cap, B)
    # v7x megacore: ensure >= 2 grid steps for mid/large batches so the "parallel"
    # axis shards across both TensorCores (a no-op loop split on 1-TC chips).
    if B > 16:
        tb = min(tb, _round_up(-(-B // 2), 8))
    if tb < B:
        tb = max(8, (tb // 8) * 8)           # sublane alignment when not a full-B block
    grid = (pl.cdiv(B, tb),)

    vmem_need = resident + per_row * tb
    vmem_limit = int(min(max(2 * vmem_need, 32 * 1024 * 1024), 56 * 1024 * 1024))

    cost = pl.CostEstimate(
        flops=2 * B * (d_in * d_pad + d_pad * d_pad),
        transcendentals=B * d_pad,
        bytes_accessed=(B * d_in * x_item + B * d_pad * o_item
                        + (d_in * d_pad + d_pad * d_pad) * w_item + 2 * d_pad * 4),
    )

    out = pl.pallas_call(
        vector_embedding_kernel,
        out_shape=jax.ShapeDtypeStruct((B, d_pad), o_dtype),
        grid=grid,
        in_specs=[
            pl.BlockSpec((tb, d_in), lambda i: (i, 0)),     # x: streamed over the batch
            _resident_block_spec((d_in, d_pad)),            # w1: resident, single-buffered
            _resident_block_spec((1, d_pad)),               # b1
            _resident_block_spec((d_pad, d_pad)),           # w2
            _resident_block_spec((1, d_pad)),               # b2
        ],
        out_specs=pl.BlockSpec((tb, d_pad), lambda i: (i, 0)),  # lane-dense output tile
        compiler_params=pltpu.CompilerParams(
            dimension_semantics=("parallel",),
            vmem_limit_bytes=vmem_limit),
        cost_estimate=cost,
    )(x, w1c, b1_2d, w2c, b2_2d)

    if d_pad != d_out:
        out = out[:, :d_out]
    return out


def reference(x, w1_t, b1, w2_t, b2):
    h = x @ w1_t + b1
    h = h * jax.nn.sigmoid(h)
    return h @ w2_t + b2


if __name__ == "__main__":
    key = jax.random.PRNGKey(0)

    def make_case(key, B, input_features, num_features):
        k_x, k_w1, k_b1, k_w2, k_b2 = jax.random.split(key, 5)
        x = jax.random.normal(k_x, (B, input_features), jnp.float32)
        # PyTorch weight is (out, in); we store it pre-transposed as (in, out).
        w1_t = jax.random.normal(k_w1, (input_features, num_features), jnp.float32) * 0.02
        b1 = jax.random.normal(k_b1, (num_features,), jnp.float32) * 0.01
        w2_t = jax.random.normal(k_w2, (num_features, num_features), jnp.float32) * 0.02
        b2 = jax.random.normal(k_b2, (num_features,), jnp.float32) * 0.01
        return x, w1_t, b1, w2_t, b2

    # Case 1: small shapes consistent with the module (B=8, 64 -> 128).
    k1, k2 = jax.random.split(key)
    args1 = make_case(k1, B=8, input_features=64, num_features=128)
    out1 = jax.block_until_ready(vector_embedding(*args1))
    ref1 = reference(*args1)
    assert out1.shape == (8, 128)
    assert jnp.allclose(out1, ref1, atol=5e-3, rtol=5e-3), "mismatch vs reference (case 1)"

    # Case 2: non-divisible batch (B=20 -> two grid steps, partial last tile) and
    # num_features not a multiple of 128 (exercises the padding path).
    args2 = make_case(k2, B=20, input_features=64, num_features=96)
    out2 = jax.block_until_ready(vector_embedding(*args2))
    ref2 = reference(*args2)
    assert out2.shape == (20, 96)
    assert jnp.allclose(out2, ref2, atol=5e-3, rtol=5e-3), "mismatch vs reference (case 2)"

    print("KERNEL_OK")
</pallas_src>

<mosaic_0001>
module attributes {stable_mosaic.version = 11 : i64} {
  func.func @vector_embedding_kernel(%arg0: i32, %arg1: memref<8x64xf32, #tpu.memory_space<vmem>>, %arg2: memref<64x128xbf16, #tpu.memory_space<vmem>>, %arg3: memref<1x128xf32, #tpu.memory_space<vmem>>, %arg4: memref<128x128xbf16, #tpu.memory_space<vmem>>, %arg5: memref<1x128xf32, #tpu.memory_space<vmem>>, %arg6: memref<8x128xf32, #tpu.memory_space<vmem>>) attributes {dimension_semantics = [#tpu.dimension_semantics<parallel>], iteration_bounds = array<i64: 1>, scalar_prefetch = 0 : i64, scratch_operands = 0 : i64, tpu.core_type = #tpu.core_type<tc>, window_params = [{transform_indices = @transform_0, window_bounds = array<i64: 8, 64>}, {pipeline_mode = #tpu.pipeline_mode<synchronous>, transform_indices = @transform_1, window_bounds = array<i64: 64, 128>}, {pipeline_mode = #tpu.pipeline_mode<synchronous>, transform_indices = @transform_2, window_bounds = array<i64: 1, 128>}, {pipeline_mode = #tpu.pipeline_mode<synchronous>, transform_indices = @transform_3, window_bounds = array<i64: 128, 128>}, {pipeline_mode = #tpu.pipeline_mode<synchronous>, transform_indices = @transform_4, window_bounds = array<i64: 1, 128>}, {transform_indices = @transform_5, window_bounds = array<i64: 8, 128>}]} {
    %c0 = arith.constant 0 : index
    %c0_0 = arith.constant 0 : index
    %0 = vector.load %arg1[%c0, %c0_0] : memref<8x64xf32, #tpu.memory_space<vmem>>, vector<8x64xf32>
    %1 = arith.truncf %0 : vector<8x64xf32> to vector<8x64xbf16>
    %c0_1 = arith.constant 0 : index
    %c0_2 = arith.constant 0 : index
    %2 = vector.load %arg2[%c0_1, %c0_2] : memref<64x128xbf16, #tpu.memory_space<vmem>>, vector<64x128xbf16>
    %cst = arith.constant dense<0.000000e+00> : vector<8x128xf32>
    %3 = tpu.matmul %1, %2, %cst {dimension_numbers = #tpu.dot_dimension_numbers<[1], [0], [0], [1], [0, 0, 1, 1], [], []>} : vector<8x64xbf16>, vector<64x128xbf16>, vector<8x128xf32> -> vector<8x128xf32>
    %c0_3 = arith.constant 0 : index
    %c0_4 = arith.constant 0 : index
    %4 = vector.load %arg3[%c0_3, %c0_4] : memref<1x128xf32, #tpu.memory_space<vmem>>, vector<1x128xf32>
    %5 = vector.broadcast %4 : vector<1x128xf32> to vector<8x128xf32>
    %6 = arith.addf %3, %5 : vector<8x128xf32>
    %cst_5 = arith.constant 5.000000e-01 : f32
    %7 = vector.broadcast %cst_5 : f32 to vector<8x128xf32>
    %8 = arith.mulf %7, %6 : vector<8x128xf32>
    %9 = math.tanh %8 : vector<8x128xf32>
    %cst_6 = arith.constant 1.000000e+00 : f32
    %10 = vector.broadcast %cst_6 : f32 to vector<8x128xf32>
    %11 = arith.addf %10, %9 : vector<8x128xf32>
    %cst_7 = arith.constant 5.000000e-01 : f32
    %12 = vector.broadcast %cst_7 : f32 to vector<8x128xf32>
    %13 = arith.mulf %12, %11 : vector<8x128xf32>
    %14 = arith.mulf %6, %13 : vector<8x128xf32>
    %15 = arith.truncf %14 : vector<8x128xf32> to vector<8x128xbf16>
    %c0_8 = arith.constant 0 : index
    %c0_9 = arith.constant 0 : index
    %16 = vector.load %arg4[%c0_8, %c0_9] : memref<128x128xbf16, #tpu.memory_space<vmem>>, vector<128x128xbf16>
    %cst_10 = arith.constant dense<0.000000e+00> : vector<8x128xf32>
    %17 = tpu.matmul %15, %16, %cst_10 {dimension_numbers = #tpu.dot_dimension_numbers<[1], [0], [0], [1], [0, 0, 1, 1], [], []>} : vector<8x128xbf16>, vector<128x128xbf16>, vector<8x128xf32> -> vector<8x128xf32>
    %c0_11 = arith.constant 0 : index
    %c0_12 = arith.constant 0 : index
    %18 = vector.load %arg5[%c0_11, %c0_12] : memref<1x128xf32, #tpu.memory_space<vmem>>, vector<1x128xf32>
    %19 = vector.broadcast %18 : vector<1x128xf32> to vector<8x128xf32>
    %20 = arith.addf %17, %19 : vector<8x128xf32>
    %c0_13 = arith.constant 0 : index
    %c0_14 = arith.constant 0 : index
    %21 = vector.load %arg6[%c0_13, %c0_14] : memref<8x128xf32, #tpu.memory_space<vmem>>, vector<8x128xf32>
    tpu.vector_store %arg6[%c0_13, %c0_14], %20 {strides = array<i32>} : memref<8x128xf32, #tpu.memory_space<vmem>>, vector<8x128xf32>,
    return
  }
  func.func @transform_0(%arg0: i32) -> (i32, i32) {
    %c0_i32 = arith.constant 0 : i32
    %c0_i32_0 = arith.constant 0 : i32
    return %arg0, %c0_i32 : i32, i32
  }
  func.func @transform_1(%arg0: i32) -> (i32, i32) {
    %c0_i32 = arith.constant 0 : i32
    %c0_i32_0 = arith.constant 0 : i32
    %c0_i32_1 = arith.constant 0 : i32
    return %c0_i32, %c0_i32_0 : i32, i32
  }
  func.func @transform_2(%arg0: i32) -> (i32, i32) {
    %c0_i32 = arith.constant 0 : i32
    %c0_i32_0 = arith.constant 0 : i32
    %c0_i32_1 = arith.constant 0 : i32
    return %c0_i32, %c0_i32_0 : i32, i32
  }
  func.func @transform_3(%arg0: i32) -> (i32, i32) {
    %c0_i32 = arith.constant 0 : i32
    %c0_i32_0 = arith.constant 0 : i32
    %c0_i32_1 = arith.constant 0 : i32
    return %c0_i32, %c0_i32_0 : i32, i32
  }
  func.func @transform_4(%arg0: i32) -> (i32, i32) {
    %c0_i32 = arith.constant 0 : i32
    %c0_i32_0 = arith.constant 0 : i32
    %c0_i32_1 = arith.constant 0 : i32
    return %c0_i32, %c0_i32_0 : i32, i32
  }
  func.func @transform_5(%arg0: i32) -> (i32, i32) {
    %c0_i32 = arith.constant 0 : i32
    %c0_i32_0 = arith.constant 0 : i32
    return %arg0, %c0_i32 : i32, i32
  }
}

</mosaic_0001>

<llo_original>
// kernel: tpu_custom_call.1
$region0: #{tpu_custom_call.1}
  #allocation0 [shape = 'u32[]', space=smem, size = 0x4, offset = 0x4, fixed_abs, tag = 'smem constant byte address 0x4 - core index']
  #allocation1 [shape = 'u32[72,128]{1,0:T(1,128)}', space=vmem, size = 0x9000, scoped, tag = 'internal scratch']
  %s0 = inlined_call_operand.hbm [shape: f32[8,64], index: 0, kind: input, shape index: {}]
  %s1 = inlined_call_operand.hbm [shape: bf16[64,128], index: 1, kind: input, shape index: {}]
  %s2 = inlined_call_operand.vmem [shape: f32[1,128], index: 2, kind: input, shape index: {}]
  %s3 = inlined_call_operand.hbm [shape: bf16[128,128], index: 3, kind: input, shape index: {}]
  %s4 = inlined_call_operand.vmem [shape: f32[1,128], index: 4, kind: input, shape index: {}]
  %s5 = inlined_call_operand.hbm [shape: f32[8,128], index: 5, kind: output, shape index: {}]
  %s6 = sld [smem:[#allocation0]]
  $region42: #{tpu_custom_call.1} parent=0
    _
  %s8 = ssub.s32 1, %s6
  %s9 = scalar_select 0, %s8, %s6
  $region1: #{tpu_custom_call.1} parent=0
    #allocation2 [shape = 'u8[4096]{0}', space=vmem, size = 0x1000, scoped, tag = 'input window, operand 0, single buffered']
    #allocation3 [shape = 's32[1]{0}', space=sflag, size = 0x4, scoped, tag = 'scoped memory for tpu_custom_call.1']
    #allocation4 [shape = 's32[1]{0}', space=sflag, size = 0x4, scoped, tag = 'scoped memory for tpu_custom_call.1']
    #allocation5 [shape = 'u8[16384]{0}', space=vmem, size = 0x4000, scoped, tag = 'input window, operand 1, single buffered']
    #allocation6 [shape = 's32[1]{0}', space=sflag, size = 0x4, scoped, tag = 'scoped memory for tpu_custom_call.1']
    #allocation7 [shape = 'u8[32768]{0}', space=vmem, size = 0x8000, scoped, tag = 'input window, operand 3, single buffered']
    #allocation8 [shape = 'u8[4096]{0}', space=vmem, size = 0x1000, scoped, tag = 'output window, operand 0, single buffered']
    %10 = vsyncpa [#allocation3], 0
    %11 = vsyncpa [#allocation6], 0
    %12 = vsyncpa [#allocation4], 0
    // Predicated region
    $region2: #{tpu_custom_call.1} parent=1 // pred_check
      _
    $region3: #{tpu_custom_call.1} parent=1 // pred_check_branch
      %14 = sbr.rel (0) target = $region5
    $region4: #{tpu_custom_call.1} parent=1 // pred_region
      %16 = vsyncadd [#allocation3], 0
      %s18 = sshll.u32 %s0, 4
      %s19 = int_to_ptr.hbm [resolvable:$true] %s18
      %s20 = sshll.u32 [#allocation2], 4
      %s21 = int_to_ptr.vmem [resolvable:$true] %s20
      %23 = dma.hbm_to_vmem [thread:$0]  %s19, 128, %s21, [#allocation3]
    $region5: #{tpu_custom_call.1} parent=1 // pred_fallthru
      _
    // Predicated region
    $region6: #{tpu_custom_call.1} parent=1 // pred_check
      _
    $region7: #{tpu_custom_call.1} parent=1 // pred_check_branch
      %25 = sbr.rel (0) target = $region9
    $region8: #{tpu_custom_call.1} parent=1 // pred_region
      %27 = vsyncadd [#allocation6], 0
      %s28 = sshll.u32 %s1, 4
      %s29 = int_to_ptr.hbm [resolvable:$true] %s28
      %s30 = sshll.u32 [#allocation5], 4
      %s31 = int_to_ptr.vmem [resolvable:$true] %s30
      %36 = dma.hbm_to_vmem [thread:$0]  %s29, 512, %s31, [#allocation6], 64, 64, 4
    $region9: #{tpu_custom_call.1} parent=1 // pred_fallthru
      _
    // Predicated region
    $region10: #{tpu_custom_call.1} parent=1 // pred_check
      _
    $region11: #{tpu_custom_call.1} parent=1 // pred_check_branch
      %38 = sbr.rel (0) target = $region13
    $region12: #{tpu_custom_call.1} parent=1 // pred_region
      _
    $region13: #{tpu_custom_call.1} parent=1 // pred_fallthru
      _
    // Predicated region
    $region14: #{tpu_custom_call.1} parent=1 // pred_check
      _
    $region15: #{tpu_custom_call.1} parent=1 // pred_check_branch
      %40 = sbr.rel (0) target = $region17
    $region16: #{tpu_custom_call.1} parent=1 // pred_region
      %42 = vsyncadd [#allocation6], 0
      %s43 = sshll.u32 %s3, 4
      %s44 = int_to_ptr.hbm [resolvable:$true] %s43
      %s45 = sshll.u32 [#allocation7], 4
      %s46 = int_to_ptr.vmem [resolvable:$true] %s45
      %51 = dma.hbm_to_vmem [thread:$0]  %s44, 1024, %s46, [#allocation6], 64, 64, 4
    $region17: #{tpu_custom_call.1} parent=1 // pred_fallthru
      _
    // Predicated region
    $region18: #{tpu_custom_call.1} parent=1 // pred_check
      _
    $region19: #{tpu_custom_call.1} parent=1 // pred_check_branch
      %53 = sbr.rel (0) target = $region21
    $region20: #{tpu_custom_call.1} parent=1 // pred_region
      _
    $region21: #{tpu_custom_call.1} parent=1 // pred_fallthru
      _
    // Predicated region
    $region22: #{tpu_custom_call.1} parent=1 // pred_check
      _
    $region23: #{tpu_custom_call.1} parent=1 // pred_check_branch
      %55 = sbr.rel (0) target = $region25
    $region24: #{tpu_custom_call.1} parent=1 // pred_region
      %57 = dma.done [#allocation3], 128
    $region25: #{tpu_custom_call.1} parent=1 // pred_fallthru
      _
    // Predicated region
    $region26: #{tpu_custom_call.1} parent=1 // pred_check
      _
    $region27: #{tpu_custom_call.1} parent=1 // pred_check_branch
      %59 = sbr.rel (0) target = $region29
    $region28: #{tpu_custom_call.1} parent=1 // pred_region
      %61 = dma.done [#allocation6], 512
    $region29: #{tpu_custom_call.1} parent=1 // pred_fallthru
      _
    // Predicated region
    $region30: #{tpu_custom_call.1} parent=1 // pred_check
      _
    $region31: #{tpu_custom_call.1} parent=1 // pred_check_branch
      %63 = sbr.rel (0) target = $region33
    $region32: #{tpu_custom_call.1} parent=1 // pred_region
      %65 = dma.done [#allocation6], 1024
    $region33: #{tpu_custom_call.1} parent=1 // pred_fallthru
      _
    %v67 = vld [vmem:[#allocation2] sm:$0xff]
    %v68 = vpack.c.bf16 %v67, %v67
    %v69 = vld [vmem:[#allocation5] sm:$0xf]
    %v70 = vld [vmem:[#allocation5 + $0x4] sm:$0xf]
    %v71 = vld [vmem:[#allocation5 + $0x8] sm:$0xf]
    %v72 = vld [vmem:[#allocation5 + $0xc] sm:$0xf]
    %v73 = vld [vmem:[#allocation5 + $0x10] sm:$0xf]
    %v74 = vld [vmem:[#allocation5 + $0x14] sm:$0xf]
    %v75 = vld [vmem:[#allocation5 + $0x18] sm:$0xf]
    %v76 = vld [vmem:[#allocation5 + $0x1c] sm:$0xf]
    %v77 = vld [vmem:[%s2] sm:$0x1]
    %v79 = vperm.slane %v77, 0
    %v89 = vunpack.c.l.b16 %v69
    %v90 = vunpack.c.l.b16 %v70
    %v91 = vunpack.c.l.b16 %v71
    %v92 = vunpack.c.l.b16 %v72
    %v93 = vunpack.c.l.b16 %v73
    %v94 = vunpack.c.l.b16 %v74
    %v95 = vunpack.c.l.b16 %v75
    %v96 = vunpack.c.l.b16 %v76
    %v97 = vpack.c.b16 %v90, %v89
    %v98 = vpack.c.b16 %v92, %v91
    %v99 = vpack.c.b16 %v94, %v93
    %v100 = vpack.c.b16 %v96, %v95
    %vm105 = vcmask 523264
    %v107 = vsel %vm105, %v68, 0
    %109 = vmatpush.bf16.msra.mxu0 0
    %110 = vmatpush.bf16.msra.mxu0 0
    %111 = vmatpush.bf16.msra.mxu0 0
    %112 = vmatpush.bf16.msra.mxu0 0
    %113 = vmatpush.bf16.msra.mxu0 %v100
    %114 = vmatpush.bf16.msra.mxu0 %v99
    %115 = vmatpush.bf16.msra.mxu0 %v98
    %116 = vmatpush.bf16.msra.mxu0 %v97
    %117 = vmatmul.bf16.gmra.mxu0 %v107
    %v118 = vpop.f32.mrf.mxu0
    %v119 = vadd.f32 %v79, %v118
    %v120 = vpop.f32.mrf.mxu0
    %121 = vdwg.mxu0
    %v122 = vmul.f32 %v119, 0.5
    %v123 = vtanh.pop %v122
    %v124 = vadd.f32 %v123, 1.0
    %v125 = vmul.f32 %v124, 0.5
    %v126 = vmul.f32 %v119, %v125
    %v127 = vpack.c.bf16 %v126, %v126
    %v128 = vld [vmem:[#allocation7] sm:$0xf]
    %v129 = vld [vmem:[#allocation7 + $0x4] sm:$0xf]
    %v130 = vld [vmem:[#allocation7 + $0x8] sm:$0xf]
    %v131 = vld [vmem:[#allocation7 + $0xc] sm:$0xf]
    %v132 = vld [vmem:[#allocation7 + $0x10] sm:$0xf]
    %v133 = vld [vmem:[#allocation7 + $0x14] sm:$0xf]
    %v134 = vld [vmem:[#allocation7 + $0x18] sm:$0xf]
    %v135 = vld [vmem:[#allocation7 + $0x1c] sm:$0xf]
    %v136 = vld [vmem:[#allocation7 + $0x20] sm:$0xf]
    %v137 = vld [vmem:[#allocation7 + $0x24] sm:$0xf]
    %v138 = vld [vmem:[#allocation7 + $0x28] sm:$0xf]
    %v139 = vld [vmem:[#allocation7 + $0x2c] sm:$0xf]
    %v140 = vld [vmem:[#allocation7 + $0x30] sm:$0xf]
    %v141 = vld [vmem:[#allocation7 + $0x34] sm:$0xf]
    %v142 = vld [vmem:[#allocation7 + $0x38] sm:$0xf]
    %v143 = vld [vmem:[#allocation7 + $0x3c] sm:$0xf]
    %v144 = vld [vmem:[%s4] sm:$0x1]
    %v146 = vperm.slane %v144, 0
    %v164 = vunpack.c.l.b16 %v128
    %v165 = vunpack.c.l.b16 %v129
    %v166 = vunpack.c.l.b16 %v130
    %v167 = vunpack.c.l.b16 %v131
    %v168 = vunpack.c.l.b16 %v132
    %v169 = vunpack.c.l.b16 %v133
    %v170 = vunpack.c.l.b16 %v134
    %v171 = vunpack.c.l.b16 %v135
    %v172 = vunpack.c.l.b16 %v136
    %v173 = vunpack.c.l.b16 %v137
    %v174 = vunpack.c.l.b16 %v138
    %v175 = vunpack.c.l.b16 %v139
    %v176 = vunpack.c.l.b16 %v140
    %v177 = vunpack.c.l.b16 %v141
    %v178 = vunpack.c.l.b16 %v142
    %v179 = vunpack.c.l.b16 %v143
    %v180 = vpack.c.b16 %v165, %v164
    %v181 = vpack.c.b16 %v167, %v166
    %v182 = vpack.c.b16 %v169, %v168
    %v183 = vpack.c.b16 %v171, %v170
    %v184 = vpack.c.b16 %v173, %v172
    %v185 = vpack.c.b16 %v175, %v174
    %v186 = vpack.c.b16 %v177, %v176
    %v187 = vpack.c.b16 %v179, %v178
    %196 = vmatpush.bf16.msra.mxu0 %v187
    %197 = vmatpush.bf16.msra.mxu0 %v186
    %198 = vmatpush.bf16.msra.mxu0 %v185
    %199 = vmatpush.bf16.msra.mxu0 %v184
    %200 = vmatpush.bf16.msra.mxu0 %v183
    %201 = vmatpush.bf16.msra.mxu0 %v182
    %202 = vmatpush.bf16.msra.mxu0 %v181
    %203 = vmatpush.bf16.msra.mxu0 %v180
    %204 = vmatmul.bf16.gmra.mxu0 %v127
    %v205 = vpop.f32.mrf.mxu0
    %v206 = vadd.f32 %v146, %v205
    %v207 = vpop.f32.mrf.mxu0
    %208 = vdwg.mxu0
    %209 = vst [vmem:[#allocation8] sm:$0xff] %v206
    // Predicated region
    $region34: #{tpu_custom_call.1} parent=1 // pred_check
      _
    $region35: #{tpu_custom_call.1} parent=1 // pred_check_branch
      %211 = sbr.rel (0) target = $region37
    $region36: #{tpu_custom_call.1} parent=1 // pred_region
      %213 = vsyncadd [#allocation4], 0
      %s215 = sshll.u32 [#allocation8], 4
      %s216 = int_to_ptr.vmem [resolvable:$true] %s215
      %s217 = sshll.u32 %s5, 4
      %s218 = int_to_ptr.hbm [resolvable:$true] %s217
      %220 = dma.vmem_to_hbm [thread:$0]  %s216, 128, %s218, [#allocation4]
    $region37: #{tpu_custom_call.1} parent=1 // pred_fallthru
      _
    // Predicated region
    $region38: #{tpu_custom_call.1} parent=1 // pred_check
      _
    $region39: #{tpu_custom_call.1} parent=1 // pred_check_branch
      %222 = sbr.rel (0) target = $region41
    $region40: #{tpu_custom_call.1} parent=1 // pred_region
      %224 = dma.done [#allocation4], 128
    $region41: #{tpu_custom_call.1} parent=1 // pred_fallthru
      _
    %225 = vsyncpa [#allocation3], 1
    %226 = vsyncpa [#allocation6], 1
    %227 = vsyncpa [#allocation4], 1

</llo_original>
